<compile_context>
chip_gen: v7x
topology: tpu7x:2x2x1
jax: 0.10.0
libtpu: 0.0.40
codegen_flags: <defaults>
</compile_context>

<pallas_src>
import jax
import jax.numpy as jnp
from jax import lax
from jax.experimental import pallas as pl
from jax.experimental.pallas import tpu as pltpu


# ---------------------------------------------------------------------------
# h_sigmoid: y = relu6(x + 3) / 6   (elementwise; tiled + lane-dense)
# ---------------------------------------------------------------------------
def _h_sigmoid_kernel(x_ref, o_ref):
    x = x_ref[...]
    o_ref[...] = (jnp.clip(x + 3.0, 0.0, 6.0) * (1.0 / 6.0)).astype(o_ref.dtype)


def h_sigmoid(x, *, lanes=512, tile_rows=1024):
    """Elementwise relu6(x+3)/6 for an array of any shape."""
    orig_shape = x.shape
    n = x.size
    flat = x.reshape(-1)
    rows = pl.cdiv(n, lanes)
    pad = rows * lanes - n
    if pad:
        flat = jnp.pad(flat, (0, pad))
    x2d = flat.reshape(rows, lanes)
    tm = min(tile_rows, rows)  # tile_rows is a multiple of 8; else full extent
    out = pl.pallas_call(
        _h_sigmoid_kernel,
        out_shape=jax.ShapeDtypeStruct((rows, lanes), x.dtype),
        grid=(pl.cdiv(rows, tm),),
        in_specs=[pl.BlockSpec((tm, lanes), lambda i: (i, 0))],
        out_specs=pl.BlockSpec((tm, lanes), lambda i: (i, 0)),
        compiler_params=pltpu.CompilerParams(
            dimension_semantics=("parallel",)),
        cost_estimate=pl.CostEstimate(
            flops=3 * n, transcendentals=0,
            bytes_accessed=2 * n * x.dtype.itemsize),
    )(x2d)
    return out.reshape(-1)[:n].reshape(orig_shape)


# ---------------------------------------------------------------------------
# Bilinear x2 upsample, align_corners=True (separable interpolation matmuls)
# ---------------------------------------------------------------------------
def _interp_matrix(out_size, in_size):
    idx = jnp.arange(out_size, dtype=jnp.float32)
    src = idx * float(in_size - 1) / float(max(out_size - 1, 1))
    i0 = jnp.floor(src).astype(jnp.int32)
    i1 = jnp.minimum(i0 + 1, in_size - 1)
    f = src - i0.astype(jnp.float32)
    return (jax.nn.one_hot(i0, in_size, dtype=jnp.float32) * (1.0 - f)[:, None]
            + jax.nn.one_hot(i1, in_size, dtype=jnp.float32) * f[:, None])


def _upsample_kernel(x_ref, a_ref, b_ref, o_ref):
    x = x_ref[...].astype(jnp.float32)                 # (TB, Hin, Win)
    A = a_ref[...]                                     # (Hout, Hin)
    B = b_ref[...]                                     # (Wout, Win)
    tb = x.shape[0]
    Ab = jnp.broadcast_to(A, (tb,) + A.shape)
    Bb = jnp.broadcast_to(B, (tb,) + B.shape)
    # y[b, ho, wo] = sum_{h,w} A[ho,h] * x[b,h,w] * B[wo,w]
    t = jnp.einsum('bhp,bpq->bhq', Ab, x, preferred_element_type=jnp.float32)
    y = jnp.einsum('bhq,bwq->bhw', t, Bb, preferred_element_type=jnp.float32)
    o_ref[...] = y.astype(o_ref.dtype)


def upsample_bilinear_2x(x):
    """NCHW bilinear x2 upsample with align_corners=True."""
    n, c, h, w = x.shape
    ho, wo = 2 * h, 2 * w
    A = _interp_matrix(ho, h)
    B = _interp_matrix(wo, w)
    nc = n * c
    xb = x.reshape(nc, h, w)
    tb = min(nc, 128)
    out = pl.pallas_call(
        _upsample_kernel,
        out_shape=jax.ShapeDtypeStruct((nc, ho, wo), x.dtype),
        grid=(pl.cdiv(nc, tb),),
        in_specs=[
            pl.BlockSpec((tb, h, w), lambda i: (i, 0, 0)),
            pl.BlockSpec((ho, h), lambda i: (0, 0)),
            pl.BlockSpec((wo, w), lambda i: (0, 0)),
        ],
        out_specs=pl.BlockSpec((tb, ho, wo), lambda i: (i, 0, 0)),
        compiler_params=pltpu.CompilerParams(
            dimension_semantics=("parallel",)),
    )(xb, A, B)
    return out.reshape(n, c, ho, wo)


# ---------------------------------------------------------------------------
# Fused 3x3 conv (stride 1, pad 1) + folded BatchNorm + ReLU.
# BN scale is pre-folded into the weight matrix, BN shift (+ conv bias) into a
# per-channel bias, so the kernel is one MXU matmul + bias + ReLU.
# Output kept lane-dense as (Cout, N*H*W) and tiled over the lane axis.
# ---------------------------------------------------------------------------
def _conv_bn_relu_kernel(w_ref, b_ref, p_ref, o_ref):
    acc = jnp.dot(w_ref[...], p_ref[...], preferred_element_type=jnp.float32)
    o_ref[...] = jnp.maximum(acc + b_ref[...], 0.0).astype(o_ref.dtype)


def conv3x3_bn_relu(x, w, scale, shift, *, tm_bytes=2 << 20):
    n, c, h, wd = x.shape
    cout = w.shape[0]
    k = c * 9
    m = n * h * wd

    # im2col (pure data movement; all compute stays in the Pallas kernel).
    xp = jnp.pad(x, ((0, 0), (0, 0), (1, 1), (1, 1)))
    patches = jnp.stack(
        [xp[:, :, ky:ky + h, kx:kx + wd] for ky in range(3) for kx in range(3)],
        axis=2)                                        # (N, C, 9, H, W)
    patches = patches.transpose(1, 2, 0, 3, 4).reshape(k, m)   # (K, M)

    # Lane-dense: pad M up to a multiple of 128.
    mp = pl.cdiv(m, 128) * 128
    if mp != m:
        patches = jnp.pad(patches, ((0, 0), (0, mp - m)))

    # Tile over M, ~tm_bytes of patch data per tile (fits v5e scoped VMEM).
    tm = max(128, min(2048, (tm_bytes // (k * 4)) // 128 * 128))
    tm = min(tm, mp)

    # Fold BN scale into the weights, BN shift into the bias.
    w2d = (w.reshape(cout, k).astype(jnp.float32)
           * scale.reshape(cout, 1).astype(jnp.float32))
    b2d = shift.reshape(cout, 1).astype(jnp.float32)

    out = pl.pallas_call(
        _conv_bn_relu_kernel,
        out_shape=jax.ShapeDtypeStruct((cout, mp), x.dtype),
        grid=(pl.cdiv(mp, tm),),
        in_specs=[
            pl.BlockSpec((cout, k), lambda j: (0, 0)),
            pl.BlockSpec((cout, 1), lambda j: (0, 0)),
            pl.BlockSpec((k, tm), lambda j: (0, j)),
        ],
        out_specs=pl.BlockSpec((cout, tm), lambda j: (0, j)),
        compiler_params=pltpu.CompilerParams(
            dimension_semantics=("parallel",)),
        cost_estimate=pl.CostEstimate(
            flops=2 * cout * k * mp + 2 * cout * mp, transcendentals=0,
            bytes_accessed=4 * (cout * k + k * mp + 2 * cout * mp)),
    )(w2d, b2d, patches.astype(jnp.float32))

    out = out[:, :m].reshape(cout, n, h, wd).transpose(1, 0, 2, 3)
    return out.astype(x.dtype)


def fold_conv_bn(bias, gamma, beta, mean, var, eps=1e-5):
    inv = gamma / jnp.sqrt(var + eps)
    scale = inv
    shift = beta - mean * inv + bias * inv
    return scale, shift


# ---------------------------------------------------------------------------
# Up.forward (bilinear=True, se=False)
# ---------------------------------------------------------------------------
def up_forward(x1, x2, params):
    x1 = upsample_bilinear_2x(x1)
    dy = x2.shape[2] - x1.shape[2]
    dx = x2.shape[3] - x1.shape[3]
    if dy or dx:
        x1 = jnp.pad(x1, ((0, 0), (0, 0),
                          (dy // 2, dy - dy // 2), (dx // 2, dx - dx // 2)))
    x = jnp.concatenate([x2, x1], axis=1)
    # TODO(synk): CoordAtt attention (se=True branch) and the bilinear=False
    # ConvTranspose2d branch are not implemented; `Up` defaults to
    # bilinear=True / se=False so the forward semantics here are complete.
    x = conv3x3_bn_relu(x, params["w1"], params["scale1"], params["shift1"])
    x = conv3x3_bn_relu(x, params["w2"], params["scale2"], params["shift2"])
    return x


# ---------------------------------------------------------------------------
# Pure-JAX reference
# ---------------------------------------------------------------------------
def _upsample_ref(x):
    n, c, h, w = x.shape
    ho, wo = 2 * h, 2 * w
    hs = jnp.arange(ho) * (h - 1) / max(ho - 1, 1)
    ws = jnp.arange(wo) * (w - 1) / max(wo - 1, 1)
    h0 = jnp.floor(hs).astype(jnp.int32)
    h1 = jnp.minimum(h0 + 1, h - 1)
    hf = (hs - h0).astype(x.dtype)
    w0 = jnp.floor(ws).astype(jnp.int32)
    w1 = jnp.minimum(w0 + 1, w - 1)
    wf = (ws - w0).astype(x.dtype)
    top = (x[:, :, h0, :] * (1 - hf)[None, None, :, None]
           + x[:, :, h1, :] * hf[None, None, :, None])
    return (top[:, :, :, w0] * (1 - wf)[None, None, None, :]
            + top[:, :, :, w1] * wf[None, None, None, :])


def _conv_bn_relu_ref(x, w, b, gamma, beta, mean, var, eps=1e-5):
    z = lax.conv_general_dilated(
        x, w, window_strides=(1, 1), padding=((1, 1), (1, 1)),
        dimension_numbers=("NCHW", "OIHW", "NCHW"),
        precision=lax.Precision.HIGHEST)
    z = z + b[None, :, None, None]
    z = (z - mean[None, :, None, None]) / jnp.sqrt(var + eps)[None, :, None, None]
    z = z * gamma[None, :, None, None] + beta[None, :, None, None]
    return jnp.maximum(z, 0.0)


def _up_ref(x1, x2, p):
    x1 = _upsample_ref(x1)
    dy = x2.shape[2] - x1.shape[2]
    dx = x2.shape[3] - x1.shape[3]
    x1 = jnp.pad(x1, ((0, 0), (0, 0),
                      (dy // 2, dy - dy // 2), (dx // 2, dx - dx // 2)))
    x = jnp.concatenate([x2, x1], axis=1)
    x = _conv_bn_relu_ref(x, p["w1"], p["b1"], p["g1"], p["be1"], p["m1"], p["v1"])
    x = _conv_bn_relu_ref(x, p["w2"], p["b2"], p["g2"], p["be2"], p["m2"], p["v2"])
    return x


if __name__ == "__main__":
    key = jax.random.PRNGKey(0)
    ks = jax.random.split(key, 16)

    # Up(in_ch=8, out_ch=8): x1 has 4 channels at half resolution, x2 has 4
    # channels at full resolution; concat -> 8 channels.
    x1 = jax.random.normal(ks[0], (2, 4, 8, 8), jnp.float32)
    x2 = jax.random.normal(ks[1], (2, 4, 16, 16), jnp.float32)
    in_ch, out_ch = 8, 8
    eps = 1e-5

    raw = {
        "w1": jax.random.normal(ks[2], (out_ch, in_ch, 3, 3), jnp.float32) * 0.2,
        "b1": jax.random.normal(ks[3], (out_ch,), jnp.float32) * 0.1,
        "g1": 1.0 + 0.1 * jax.random.normal(ks[4], (out_ch,), jnp.float32),
        "be1": 0.1 * jax.random.normal(ks[5], (out_ch,), jnp.float32),
        "m1": 0.1 * jax.random.normal(ks[6], (out_ch,), jnp.float32),
        "v1": 0.9 + 0.1 * jnp.abs(jax.random.normal(ks[7], (out_ch,), jnp.float32)),
        "w2": jax.random.normal(ks[8], (out_ch, out_ch, 3, 3), jnp.float32) * 0.2,
        "b2": jax.random.normal(ks[9], (out_ch,), jnp.float32) * 0.1,
        "g2": 1.0 + 0.1 * jax.random.normal(ks[10], (out_ch,), jnp.float32),
        "be2": 0.1 * jax.random.normal(ks[11], (out_ch,), jnp.float32),
        "m2": 0.1 * jax.random.normal(ks[12], (out_ch,), jnp.float32),
        "v2": 0.9 + 0.1 * jnp.abs(jax.random.normal(ks[13], (out_ch,), jnp.float32)),
    }
    s1, sh1 = fold_conv_bn(raw["b1"], raw["g1"], raw["be1"], raw["m1"], raw["v1"], eps)
    s2, sh2 = fold_conv_bn(raw["b2"], raw["g2"], raw["be2"], raw["m2"], raw["v2"], eps)
    params = {"w1": raw["w1"], "scale1": s1, "shift1": sh1,
              "w2": raw["w2"], "scale2": s2, "shift2": sh2}

    y = up_forward(x1, x2, params)
    y = jax.block_until_ready(y)
    y_ref = _up_ref(x1, x2, raw)
    assert y.shape == (2, out_ch, 16, 16)
    assert jnp.allclose(y, y_ref, atol=1e-3, rtol=1e-3), "Up forward mismatch"

    # Tiled, lane-dense h_sigmoid kernel — building block for the se=True
    # CoordAtt branch; checked standalone.
    xh = jax.random.normal(ks[14], (2, 4, 16, 16), jnp.float32) * 4.0
    yh = jax.block_until_ready(h_sigmoid(xh))
    assert jnp.allclose(yh, jnp.clip(xh + 3.0, 0.0, 6.0) / 6.0, atol=1e-6)

    print("KERNEL_OK")
</pallas_src>

<mosaic_0001>
module attributes {stable_mosaic.version = 11 : i64} {
  func.func @_upsample_kernel(%arg0: i32, %arg1: memref<8x8x8xf32, #tpu.memory_space<vmem>>, %arg2: memref<16x8xf32, #tpu.memory_space<vmem>>, %arg3: memref<16x8xf32, #tpu.memory_space<vmem>>, %arg4: memref<8x16x16xf32, #tpu.memory_space<vmem>>) attributes {dimension_semantics = [#tpu.dimension_semantics<parallel>], iteration_bounds = array<i64: 1>, scalar_prefetch = 0 : i64, scratch_operands = 0 : i64, tpu.core_type = #tpu.core_type<tc>, window_params = [{transform_indices = @transform_0, window_bounds = array<i64: 8, 8, 8>}, {pipeline_mode = #tpu.pipeline_mode<synchronous>, transform_indices = @transform_1, window_bounds = array<i64: 16, 8>}, {pipeline_mode = #tpu.pipeline_mode<synchronous>, transform_indices = @transform_2, window_bounds = array<i64: 16, 8>}, {transform_indices = @transform_3, window_bounds = array<i64: 8, 16, 16>}]} {
    %c0 = arith.constant 0 : index
    %c0_0 = arith.constant 0 : index
    %c0_1 = arith.constant 0 : index
    %0 = vector.load %arg1[%c0, %c0_0, %c0_1] : memref<8x8x8xf32, #tpu.memory_space<vmem>>, vector<8x8x8xf32>
    %c0_2 = arith.constant 0 : index
    %c0_3 = arith.constant 0 : index
    %1 = vector.load %arg2[%c0_2, %c0_3] : memref<16x8xf32, #tpu.memory_space<vmem>>, vector<16x8xf32>
    %c0_4 = arith.constant 0 : index
    %c0_5 = arith.constant 0 : index
    %2 = vector.load %arg3[%c0_4, %c0_5] : memref<16x8xf32, #tpu.memory_space<vmem>>, vector<16x8xf32>
    %3 = vector.shape_cast %1 : vector<16x8xf32> to vector<1x16x8xf32>
    %4 = vector.broadcast %3 : vector<1x16x8xf32> to vector<8x16x8xf32>
    %5 = vector.shape_cast %2 : vector<16x8xf32> to vector<1x16x8xf32>
    %6 = vector.broadcast %5 : vector<1x16x8xf32> to vector<8x16x8xf32>
    "tpu.trace_start"() <{level = 10 : i32, message = "bhp,bpq->bhq"}> : () -> ()
    %cst = arith.constant dense<0.000000e+00> : vector<8x16x8xf32>
    %7 = tpu.matmul %4, %0, %cst {dimension_numbers = #tpu.dot_dimension_numbers<[2], [1], [1], [2], [0, 0, 0, 1, 1, 2], [0], [0]>} : vector<8x16x8xf32>, vector<8x8x8xf32>, vector<8x16x8xf32> -> vector<8x16x8xf32>
    "tpu.trace_stop"() : () -> ()
    "tpu.trace_start"() <{level = 10 : i32, message = "bhq,bwq->bhw"}> : () -> ()
    %cst_6 = arith.constant dense<0.000000e+00> : vector<8x16x16xf32>
    %8 = tpu.matmul %7, %6, %cst_6 {dimension_numbers = #tpu.dot_dimension_numbers<[2], [2], [1], [1], [0, 0, 0, 1, 1, 1], [0], [0]>} : vector<8x16x8xf32>, vector<8x16x8xf32>, vector<8x16x16xf32> -> vector<8x16x16xf32>
    "tpu.trace_stop"() : () -> ()
    %c0_7 = arith.constant 0 : index
    %c0_8 = arith.constant 0 : index
    %c0_9 = arith.constant 0 : index
    %9 = vector.load %arg4[%c0_7, %c0_8, %c0_9] : memref<8x16x16xf32, #tpu.memory_space<vmem>>, vector<8x16x16xf32>
    tpu.vector_store %arg4[%c0_7, %c0_8, %c0_9], %8 {strides = array<i32>} : memref<8x16x16xf32, #tpu.memory_space<vmem>>, vector<8x16x16xf32>,
    return
  }
  func.func @transform_0(%arg0: i32) -> (i32, i32, i32) {
    %c0_i32 = arith.constant 0 : i32
    %c0_i32_0 = arith.constant 0 : i32
    %c0_i32_1 = arith.constant 0 : i32
    return %arg0, %c0_i32, %c0_i32_0 : i32, i32, i32
  }
  func.func @transform_1(%arg0: i32) -> (i32, i32) {
    %c0_i32 = arith.constant 0 : i32
    %c0_i32_0 = arith.constant 0 : i32
    %c0_i32_1 = arith.constant 0 : i32
    return %c0_i32, %c0_i32_0 : i32, i32
  }
  func.func @transform_2(%arg0: i32) -> (i32, i32) {
    %c0_i32 = arith.constant 0 : i32
    %c0_i32_0 = arith.constant 0 : i32
    %c0_i32_1 = arith.constant 0 : i32
    return %c0_i32, %c0_i32_0 : i32, i32
  }
  func.func @transform_3(%arg0: i32) -> (i32, i32, i32) {
    %c0_i32 = arith.constant 0 : i32
    %c0_i32_0 = arith.constant 0 : i32
    %c0_i32_1 = arith.constant 0 : i32
    return %arg0, %c0_i32, %c0_i32_0 : i32, i32, i32
  }
}

</mosaic_0001>

<llo_original>
// kernel: tpu_custom_call.1
$region0: #{tpu_custom_call.1}
  #allocation0 [shape = 'u32[]', space=smem, size = 0x4, offset = 0x4, fixed_abs, tag = 'smem constant byte address 0x4 - core index']
  #allocation1 [shape = 'u32[144,128]{1,0:T(1,128)}', space=vmem, size = 0x12000, scoped, tag = 'internal scratch']
  %s0 = inlined_call_operand.hbm [shape: f32[8,8,8], index: 0, kind: input, shape index: {}]
  %s1 = inlined_call_operand.vmem [shape: f32[16,8], index: 1, kind: input, shape index: {}]
  %s2 = inlined_call_operand.vmem [shape: f32[16,8], index: 2, kind: input, shape index: {}]
  %s3 = inlined_call_operand.hbm [shape: f32[8,16,16], index: 3, kind: output, shape index: {}]
  %s4 = sld [smem:[#allocation0]]
  $region26: #{tpu_custom_call.1} parent=0
    _
  %s6 = ssub.s32 1, %s4
  %s7 = scalar_select 0, %s6, %s4
  $region1: #{tpu_custom_call.1} parent=0
    #allocation2 [shape = 'u8[32768]{0}', space=vmem, size = 0x8000, scoped, tag = 'input window, operand 0, single buffered']
    #allocation3 [shape = 's32[1]{0}', space=sflag, size = 0x4, scoped, tag = 'scoped memory for tpu_custom_call.1']
    #allocation4 [shape = 's32[1]{0}', space=sflag, size = 0x4, scoped, tag = 'scoped memory for tpu_custom_call.1']
    #allocation5 [shape = 'u8[65536]{0}', space=vmem, size = 0x10000, scoped, tag = 'output window, operand 0, single buffered']
    %8 = vsyncpa [#allocation3], 0
    %9 = vsyncpa [#allocation4], 0
    // Predicated region
    $region2: #{tpu_custom_call.1} parent=1 // pred_check
      _
    $region3: #{tpu_custom_call.1} parent=1 // pred_check_branch
      %11 = sbr.rel (0) target = $region5
    $region4: #{tpu_custom_call.1} parent=1 // pred_region
      %s13 = ssub.s32 1024, 1024
      %14 = vsyncadd [#allocation3], %s13
      %s15 = sshll.u32 [#allocation2], 4
      %s16 = int_to_ptr.vmem [resolvable:$true] %s15
      %21 = dma.hbm_to_vmem [thread:$0]  %s0, 1024, %s16, [#allocation3], 128, 128, 8
    $region5: #{tpu_custom_call.1} parent=1 // pred_fallthru
      _
    // Predicated region
    $region6: #{tpu_custom_call.1} parent=1 // pred_check
      _
    $region7: #{tpu_custom_call.1} parent=1 // pred_check_branch
      %23 = sbr.rel (0) target = $region9
    $region8: #{tpu_custom_call.1} parent=1 // pred_region
      _
    $region9: #{tpu_custom_call.1} parent=1 // pred_fallthru
      _
    // Predicated region
    $region10: #{tpu_custom_call.1} parent=1 // pred_check
      _
    $region11: #{tpu_custom_call.1} parent=1 // pred_check_branch
      %25 = sbr.rel (0) target = $region13
    $region12: #{tpu_custom_call.1} parent=1 // pred_region
      _
    $region13: #{tpu_custom_call.1} parent=1 // pred_fallthru
      _
    // Predicated region
    $region14: #{tpu_custom_call.1} parent=1 // pred_check
      _
    $region15: #{tpu_custom_call.1} parent=1 // pred_check_branch
      %27 = sbr.rel (0) target = $region17
    $region16: #{tpu_custom_call.1} parent=1 // pred_region
      %28 = dma.done [#allocation3], 1024
    $region17: #{tpu_custom_call.1} parent=1 // pred_fallthru
      _
    %v29 = vld [vmem:[#allocation2] sm:$0xff]
    %v30 = vld [vmem:[#allocation2 + $0x8] sm:$0xff]
    %v31 = vld [vmem:[#allocation2 + $0x10] sm:$0xff]
    %v32 = vld [vmem:[#allocation2 + $0x18] sm:$0xff]
    %v33 = vld [vmem:[#allocation2 + $0x20] sm:$0xff]
    %v34 = vld [vmem:[#allocation2 + $0x28] sm:$0xff]
    %v35 = vld [vmem:[#allocation2 + $0x30] sm:$0xff]
    %v36 = vld [vmem:[#allocation2 + $0x38] sm:$0xff]
    %v37 = vld [vmem:[%s1] sm:$0xff]
    %v38 = vld [vmem:[%s1 + $0x8] sm:$0xff]
    %v39 = vld [vmem:[%s2] sm:$0xff]
    %v40 = vld [vmem:[%s2 + $0x8] sm:$0xff]
    %vm41 = vcmask 64512
    %v43 = vsel %vm41, %v37, 0
    %v46 = vsel %vm41, %v38, 0
    %48 = vmatprep.subr.mxu0 0.0
    %49 = vmatpush1.msra.mxu0 %v29
    %50 = vmatprep.subr.mxu0 0.0
    %51 = vmatpush1.msra.mxu0 0.0
    %52 = vmatprep.subr.mxu0 0.0
    %53 = vmatpush1.msra.mxu0 0.0
    %54 = vmatprep.subr.mxu0 0.0
    %55 = vmatpush1.msra.mxu0 0.0
    %56 = vmatprep.subr.mxu0 0.0
    %57 = vmatpush1.msra.mxu0 0.0
    %58 = vmatprep.subr.mxu0 0.0
    %59 = vmatpush1.msra.mxu0 0.0
    %60 = vmatprep.subr.mxu0 0.0
    %61 = vmatpush1.msra.mxu0 0.0
    %62 = vmatprep.subr.mxu0 0.0
    %63 = vmatpush1.msra.mxu0 0.0
    %64 = vmatprep.subr.mxu0 0.0
    %65 = vmatpush1.msra.mxu0 0.0
    %66 = vmatprep.subr.mxu0 0.0
    %67 = vmatpush1.msra.mxu0 0.0
    %68 = vmatprep.subr.mxu0 0.0
    %69 = vmatpush1.msra.mxu0 0.0
    %70 = vmatprep.subr.mxu0 0.0
    %71 = vmatpush1.msra.mxu0 0.0
    %72 = vmatprep.subr.mxu0 0.0
    %73 = vmatpush1.msra.mxu0 0.0
    %74 = vmatprep.subr.mxu0 0.0
    %75 = vmatpush1.msra.mxu0 0.0
    %76 = vmatprep.subr.mxu0 0.0
    %77 = vmatpush1.msra.mxu0 0.0
    %78 = vmatprep.subr.mxu0 0.0
    %79 = vmatpush1.msra.mxu0 0.0
    %80 = vmatprep.subr.mxu0 0.0
    %81 = vmatpush1.msra.mxu0 0.0
    %82 = vmatprep.subr.mxu0 0.0
    %83 = vmatpush1.msra.mxu0 0.0
    %84 = vmatprep.subr.mxu0 0.0
    %85 = vmatpush1.msra.mxu0 0.0
    %86 = vmatprep.subr.mxu0 0.0
    %87 = vmatpush1.msra.mxu0 0.0
    %88 = vmatprep.subr.mxu0 0.0
    %89 = vmatpush1.msra.mxu0 0.0
    %90 = vmatprep.subr.mxu0 0.0
    %91 = vmatpush1.msra.mxu0 0.0
    %92 = vmatprep.subr.mxu0 0.0
    %93 = vmatpush1.msra.mxu0 0.0
    %94 = vmatprep.subr.mxu0 0.0
    %95 = vmatpush1.msra.mxu0 0.0
    %96 = vmatprep.subr.mxu0 0.0
    %97 = vmatpush1.msra.mxu0 0.0
    %98 = vmatprep.subr.mxu0 0.0
    %99 = vmatpush1.msra.mxu0 0.0
    %100 = vmatprep.subr.mxu0 0.0
    %101 = vmatpush1.msra.mxu0 0.0
    %102 = vmatprep.subr.mxu0 0.0
    %103 = vmatpush1.msra.mxu0 0.0
    %104 = vmatprep.subr.mxu0 0.0
    %105 = vmatpush1.msra.mxu0 0.0
    %106 = vmatprep.subr.mxu0 0.0
    %107 = vmatpush1.msra.mxu0 0.0
    %108 = vmatprep.subr.mxu0 0.0
    %109 = vmatpush1.msra.mxu0 0.0
    %110 = vmatprep.subr.mxu0 0.0
    %111 = vmatpush1.msra.mxu0 0.0
    %112 = vmatprep.mubr.f32.mxu0 0.0
    %113 = vmatmul.mubr.f32.gmra.mrb[0].mxu0 %v43
    %v114 = vpop.f32.mrb[0].mxu0
    %v115 = vadd.f32 0.0, %v114
    %v116 = vpop.f32.mrb[0].mxu0
    %117 = vmatprep.mubr.f32.mxu0 0.0
    %118 = vmatmul.mubr.f32.gmra.mrb[0].mxu0 %v46
    %v119 = vpop.f32.mrb[0].mxu0
    %v120 = vadd.f32 0.0, %v119
    %v121 = vpop.f32.mrb[0].mxu0
    %122 = vdwg.mxu0
    %123 = vmatprep.subr.mxu0 0.0
    %124 = vmatpush1.msra.mxu0 %v30
    %125 = vmatprep.subr.mxu0 0.0
    %126 = vmatpush1.msra.mxu0 0.0
    %127 = vmatprep.subr.mxu0 0.0
    %128 = vmatpush1.msra.mxu0 0.0
    %129 = vmatprep.subr.mxu0 0.0
    %130 = vmatpush1.msra.mxu0 0.0
    %131 = vmatprep.subr.mxu0 0.0
    %132 = vmatpush1.msra.mxu0 0.0
    %133 = vmatprep.subr.mxu0 0.0
    %134 = vmatpush1.msra.mxu0 0.0
    %135 = vmatprep.subr.mxu0 0.0
    %136 = vmatpush1.msra.mxu0 0.0
    %137 = vmatprep.subr.mxu0 0.0
    %138 = vmatpush1.msra.mxu0 0.0
    %139 = vmatprep.subr.mxu0 0.0
    %140 = vmatpush1.msra.mxu0 0.0
    %141 = vmatprep.subr.mxu0 0.0
    %142 = vmatpush1.msra.mxu0 0.0
    %143 = vmatprep.subr.mxu0 0.0
    %144 = vmatpush1.msra.mxu0 0.0
    %145 = vmatprep.subr.mxu0 0.0
    %146 = vmatpush1.msra.mxu0 0.0
    %147 = vmatprep.subr.mxu0 0.0
    %148 = vmatpush1.msra.mxu0 0.0
    %149 = vmatprep.subr.mxu0 0.0
    %150 = vmatpush1.msra.mxu0 0.0
    %151 = vmatprep.subr.mxu0 0.0
    %152 = vmatpush1.msra.mxu0 0.0
    %153 = vmatprep.subr.mxu0 0.0
    %154 = vmatpush1.msra.mxu0 0.0
    %155 = vmatprep.subr.mxu0 0.0
    %156 = vmatpush1.msra.mxu0 0.0
    %157 = vmatprep.subr.mxu0 0.0
    %158 = vmatpush1.msra.mxu0 0.0
    %159 = vmatprep.subr.mxu0 0.0
    %160 = vmatpush1.msra.mxu0 0.0
    %161 = vmatprep.subr.mxu0 0.0
    %162 = vmatpush1.msra.mxu0 0.0
    %163 = vmatprep.subr.mxu0 0.0
    %164 = vmatpush1.msra.mxu0 0.0
    %165 = vmatprep.subr.mxu0 0.0
    %166 = vmatpush1.msra.mxu0 0.0
    %167 = vmatprep.subr.mxu0 0.0
    %168 = vmatpush1.msra.mxu0 0.0
    %169 = vmatprep.subr.mxu0 0.0
    %170 = vmatpush1.msra.mxu0 0.0
    %171 = vmatprep.subr.mxu0 0.0
    %172 = vmatpush1.msra.mxu0 0.0
    %173 = vmatprep.subr.mxu0 0.0
    %174 = vmatpush1.msra.mxu0 0.0
    %175 = vmatprep.subr.mxu0 0.0
    %176 = vmatpush1.msra.mxu0 0.0
    %177 = vmatprep.subr.mxu0 0.0
    %178 = vmatpush1.msra.mxu0 0.0
    %179 = vmatprep.subr.mxu0 0.0
    %180 = vmatpush1.msra.mxu0 0.0
    %181 = vmatprep.subr.mxu0 0.0
    %182 = vmatpush1.msra.mxu0 0.0
    %183 = vmatprep.subr.mxu0 0.0
    %184 = vmatpush1.msra.mxu0 0.0
    %185 = vmatprep.subr.mxu0 0.0
    %186 = vmatpush1.msra.mxu0 0.0
    %187 = vmatprep.mubr.f32.mxu0 0.0
    %188 = vmatmul.mubr.f32.gmra.mrb[0].mxu0 %v43
    %v189 = vpop.f32.mrb[0].mxu0
    %v190 = vadd.f32 0.0, %v189
    %v191 = vpop.f32.mrb[0].mxu0
    %192 = vmatprep.mubr.f32.mxu0 0.0
    %193 = vmatmul.mubr.f32.gmra.mrb[0].mxu0 %v46
    %v194 = vpop.f32.mrb[0].mxu0
    %v195 = vadd.f32 0.0, %v194
    %v196 = vpop.f32.mrb[0].mxu0
    %197 = vdwg.mxu0
    %198 = vmatprep.subr.mxu0 0.0
    %199 = vmatpush1.msra.mxu0 %v31
    %200 = vmatprep.subr.mxu0 0.0
    %201 = vmatpush1.msra.mxu0 0.0
    %202 = vmatprep.subr.mxu0 0.0
    %203 = vmatpush1.msra.mxu0 0.0
    %204 = vmatprep.subr.mxu0 0.0
    %205 = vmatpush1.msra.mxu0 0.0
    %206 = vmatprep.subr.mxu0 0.0
    %207 = vmatpush1.msra.mxu0 0.0
    %208 = vmatprep.subr.mxu0 0.0
    %209 = vmatpush1.msra.mxu0 0.0
    %210 = vmatprep.subr.mxu0 0.0
    %211 = vmatpush1.msra.mxu0 0.0
    %212 = vmatprep.subr.mxu0 0.0
    %213 = vmatpush1.msra.mxu0 0.0
    %214 = vmatprep.subr.mxu0 0.0
    %215 = vmatpush1.msra.mxu0 0.0
    %216 = vmatprep.subr.mxu0 0.0
    %217 = vmatpush1.msra.mxu0 0.0
    %218 = vmatprep.subr.mxu0 0.0
    %219 = vmatpush1.msra.mxu0 0.0
    %220 = vmatprep.subr.mxu0 0.0
    %221 = vmatpush1.msra.mxu0 0.0
    %222 = vmatprep.subr.mxu0 0.0
    %223 = vmatpush1.msra.mxu0 0.0
    %224 = vmatprep.subr.mxu0 0.0
    %225 = vmatpush1.msra.mxu0 0.0
    %226 = vmatprep.subr.mxu0 0.0
    %227 = vmatpush1.msra.mxu0 0.0
    %228 = vmatprep.subr.mxu0 0.0
    %229 = vmatpush1.msra.mxu0 0.0
    %230 = vmatprep.subr.mxu0 0.0
    %231 = vmatpush1.msra.mxu0 0.0
    %232 = vmatprep.subr.mxu0 0.0
    %233 = vmatpush1.msra.mxu0 0.0
    %234 = vmatprep.subr.mxu0 0.0
    %235 = vmatpush1.msra.mxu0 0.0
    %236 = vmatprep.subr.mxu0 0.0
    %237 = vmatpush1.msra.mxu0 0.0
    %238 = vmatprep.subr.mxu0 0.0
    %239 = vmatpush1.msra.mxu0 0.0
    %240 = vmatprep.subr.mxu0 0.0
    %241 = vmatpush1.msra.mxu0 0.0
    %242 = vmatprep.subr.mxu0 0.0
    %243 = vmatpush1.msra.mxu0 0.0
    %244 = vmatprep.subr.mxu0 0.0
    %245 = vmatpush1.msra.mxu0 0.0
    %246 = vmatprep.subr.mxu0 0.0
    %247 = vmatpush1.msra.mxu0 0.0
    %248 = vmatprep.subr.mxu0 0.0
    %249 = vmatpush1.msra.mxu0 0.0
    %250 = vmatprep.subr.mxu0 0.0
    %251 = vmatpush1.msra.mxu0 0.0
    %252 = vmatprep.subr.mxu0 0.0
    %253 = vmatpush1.msra.mxu0 0.0
    %254 = vmatprep.subr.mxu0 0.0
    %255 = vmatpush1.msra.mxu0 0.0
    %256 = vmatprep.subr.mxu0 0.0
    %257 = vmatpush1.msra.mxu0 0.0
    %258 = vmatprep.subr.mxu0 0.0
    %259 = vmatpush1.msra.mxu0 0.0
    %260 = vmatprep.subr.mxu0 0.0
    %261 = vmatpush1.msra.mxu0 0.0
    %262 = vmatprep.mubr.f32.mxu0 0.0
    %263 = vmatmul.mubr.f32.gmra.mrb[0].mxu0 %v43
    %v264 = vpop.f32.mrb[0].mxu0
    %v265 = vadd.f32 0.0, %v264
    %v266 = vpop.f32.mrb[0].mxu0
    %267 = vmatprep.mubr.f32.mxu0 0.0
    %268 = vmatmul.mubr.f32.gmra.mrb[0].mxu0 %v46
    %v269 = vpop.f32.mrb[0].mxu0
    %v270 = vadd.f32 0.0, %v269
    %v271 = vpop.f32.mrb[0].mxu0
    %272 = vdwg.mxu0
    %273 = vmatprep.subr.mxu0 0.0
    %274 = vmatpush1.msra.mxu0 %v32
    %275 = vmatprep.subr.mxu0 0.0
    %276 = vmatpush1.msra.mxu0 0.0
    %277 = vmatprep.subr.mxu0 0.0
    %278 = vmatpush1.msra.mxu0 0.0
    %279 = vmatprep.subr.mxu0 0.0
    %280 = vmatpush1.msra.mxu0 0.0
    %281 = vmatprep.subr.mxu0 0.0
    %282 = vmatpush1.msra.mxu0 0.0
    %283 = vmatprep.subr.mxu0 0.0
    %284 = vmatpush1.msra.mxu0 0.0
    %285 = vmatprep.subr.mxu0 0.0
    %286 = vmatpush1.msra.mxu0 0.0
    %287 = vmatprep.subr.mxu0 0.0
    %288 = vmatpush1.msra.mxu0 0.0
    %289 = vmatprep.subr.mxu0 0.0
    %290 = vmatpush1.msra.mxu0 0.0
    %291 = vmatprep.subr.mxu0 0.0
    %292 = vmatpush1.msra.mxu0 0.0
    %293 = vmatprep.subr.mxu0 0.0
    %294 = vmatpush1.msra.mxu0 0.0
    %295 = vmatprep.subr.mxu0 0.0
    %296 = vmatpush1.msra.mxu0 0.0
    %297 = vmatprep.subr.mxu0 0.0
    %298 = vmatpush1.msra.mxu0 0.0
    %299 = vmatprep.subr.mxu0 0.0
    %300 = vmatpush1.msra.mxu0 0.0
    %301 = vmatprep.subr.mxu0 0.0
    %302 = vmatpush1.msra.mxu0 0.0
    %303 = vmatprep.subr.mxu0 0.0
    %304 = vmatpush1.msra.mxu0 0.0
    %305 = vmatprep.subr.mxu0 0.0
    %306 = vmatpush1.msra.mxu0 0.0
    %307 = vmatprep.subr.mxu0 0.0
    %308 = vmatpush1.msra.mxu0 0.0
    %309 = vmatprep.subr.mxu0 0.0
    %310 = vmatpush1.msra.mxu0 0.0
    %311 = vmatprep.subr.mxu0 0.0
    %312 = vmatpush1.msra.mxu0 0.0
    %313 = vmatprep.subr.mxu0 0.0
    %314 = vmatpush1.msra.mxu0 0.0
    %315 = vmatprep.subr.mxu0 0.0
    %316 = vmatpush1.msra.mxu0 0.0
    %317 = vmatprep.subr.mxu0 0.0
    %318 = vmatpush1.msra.mxu0 0.0
    %319 = vmatprep.subr.mxu0 0.0
    %320 = vmatpush1.msra.mxu0 0.0
    %321 = vmatprep.subr.mxu0 0.0
    %322 = vmatpush1.msra.mxu0 0.0
    %323 = vmatprep.subr.mxu0 0.0
    %324 = vmatpush1.msra.mxu0 0.0
    %325 = vmatprep.subr.mxu0 0.0
    %326 = vmatpush1.msra.mxu0 0.0
    %327 = vmatprep.subr.mxu0 0.0
    %328 = vmatpush1.msra.mxu0 0.0
    %329 = vmatprep.subr.mxu0 0.0
    %330 = vmatpush1.msra.mxu0 0.0
    %331 = vmatprep.subr.mxu0 0.0
    %332 = vmatpush1.msra.mxu0 0.0
    %333 = vmatprep.subr.mxu0 0.0
    %334 = vmatpush1.msra.mxu0 0.0
    %335 = vmatprep.subr.mxu0 0.0
    %336 = vmatpush1.msra.mxu0 0.0
    %337 = vmatprep.mubr.f32.mxu0 0.0
    %338 = vmatmul.mubr.f32.gmra.mrb[0].mxu0 %v43
    %v339 = vpop.f32.mrb[0].mxu0
    %v340 = vadd.f32 0.0, %v339
    %v341 = vpop.f32.mrb[0].mxu0
    %342 = vmatprep.mubr.f32.mxu0 0.0
    %343 = vmatmul.mubr.f32.gmra.mrb[0].mxu0 %v46
    %v344 = vpop.f32.mrb[0].mxu0
    %v345 = vadd.f32 0.0, %v344
    %v346 = vpop.f32.mrb[0].mxu0
    %347 = vdwg.mxu0
    %348 = vmatprep.subr.mxu0 0.0
    %349 = vmatpush1.msra.mxu0 %v33
    %350 = vmatprep.subr.mxu0 0.0
    %351 = vmatpush1.msra.mxu0 0.0
    %352 = vmatprep.subr.mxu0 0.0
    %353 = vmatpush1.msra.mxu0 0.0
    %354 = vmatprep.subr.mxu0 0.0
    %355 = vmatpush1.msra.mxu0 0.0
    %356 = vmatprep.subr.mxu0 0.0
    %357 = vmatpush1.msra.mxu0 0.0
    %358 = vmatprep.subr.mxu0 0.0
    %359 = vmatpush1.msra.mxu0 0.0
    %360 = vmatprep.subr.mxu0 0.0
    %361 = vmatpush1.msra.mxu0 0.0
    %362 = vmatprep.subr.mxu0 0.0
    %363 = vmatpush1.msra.mxu0 0.0
    %364 = vmatprep.subr.mxu0 0.0
    %365 = vmatpush1.msra.mxu0 0.0
    %366 = vmatprep.subr.mxu0 0.0
    %367 = vmatpush1.msra.mxu0 0.0
    %368 = vmatprep.subr.mxu0 0.0
    %369 = vmatpush1.msra.mxu0 0.0
    %370 = vmatprep.subr.mxu0 0.0
    %371 = vmatpush1.msra.mxu0 0.0
    %372 = vmatprep.subr.mxu0 0.0
    %373 = vmatpush1.msra.mxu0 0.0
    %374 = vmatprep.subr.mxu0 0.0
    %375 = vmatpush1.msra.mxu0 0.0
    %376 = vmatprep.subr.mxu0 0.0
    %377 = vmatpush1.msra.mxu0 0.0
    %378 = vmatprep.subr.mxu0 0.0
    %379 = vmatpush1.msra.mxu0 0.0
    %380 = vmatprep.subr.mxu0 0.0
    %381 = vmatpush1.msra.mxu0 0.0
    %382 = vmatprep.subr.mxu0 0.0
    %383 = vmatpush1.msra.mxu0 0.0
    %384 = vmatprep.subr.mxu0 0.0
    %385 = vmatpush1.msra.mxu0 0.0
    %386 = vmatprep.subr.mxu0 0.0
    %387 = vmatpush1.msra.mxu0 0.0
    %388 = vmatprep.subr.mxu0 0.0
    %389 = vmatpush1.msra.mxu0 0.0
    %390 = vmatprep.subr.mxu0 0.0
    %391 = vmatpush1.msra.mxu0 0.0
    %392 = vmatprep.subr.mxu0 0.0
    %393 = vmatpush1.msra.mxu0 0.0
    %394 = vmatprep.subr.mxu0 0.0
    %395 = vmatpush1.msra.mxu0 0.0
    %396 = vmatprep.subr.mxu0 0.0
    %397 = vmatpush1.msra.mxu0 0.0
    %398 = vmatprep.subr.mxu0 0.0
    %399 = vmatpush1.msra.mxu0 0.0
    %400 = vmatprep.subr.mxu0 0.0
    %401 = vmatpush1.msra.mxu0 0.0
    %402 = vmatprep.subr.mxu0 0.0
    %403 = vmatpush1.msra.mxu0 0.0
    %404 = vmatprep.subr.mxu0 0.0
    %405 = vmatpush1.msra.mxu0 0.0
    %406 = vmatprep.subr.mxu0 0.0
    %407 = vmatpush1.msra.mxu0 0.0
    %408 = vmatprep.subr.mxu0 0.0
    %409 = vmatpush1.msra.mxu0 0.0
    %410 = vmatprep.subr.mxu0 0.0
    %411 = vmatpush1.msra.mxu0 0.0
    %412 = vmatprep.mubr.f32.mxu0 0.0
    %413 = vmatmul.mubr.f32.gmra.mrb[0].mxu0 %v43
    %v414 = vpop.f32.mrb[0].mxu0
    %v415 = vadd.f32 0.0, %v414
    %v416 = vpop.f32.mrb[0].mxu0
    %417 = vmatprep.mubr.f32.mxu0 0.0
    %418 = vmatmul.mubr.f32.gmra.mrb[0].mxu0 %v46
    %v419 = vpop.f32.mrb[0].mxu0
    %v420 = vadd.f32 0.0, %v419
    %v421 = vpop.f32.mrb[0].mxu0
    %422 = vdwg.mxu0
    %423 = vmatprep.subr.mxu0 0.0
    %424 = vmatpush1.msra.mxu0 %v34
    %425 = vmatprep.subr.mxu0 0.0
    %426 = vmatpush1.msra.mxu0 0.0
    %427 = vmatprep.subr.mxu0 0.0
    %428 = vmatpush1.msra.mxu0 0.0
    %429 = vmatprep.subr.mxu0 0.0
    %430 = vmatpush1.msra.mxu0 0.0
    %431 = vmatprep.subr.mxu0 0.0
    %432 = vmatpush1.msra.mxu0 0.0
    %433 = vmatprep.subr.mxu0 0.0
    %434 = vmatpush1.msra.mxu0 0.0
    %435 = vmatprep.subr.mxu0 0.0
    %436 = vmatpush1.msra.mxu0 0.0
    %437 = vmatprep.subr.mxu0 0.0
    %438 = vmatpush1.msra.mxu0 0.0
    %439 = vmatprep.subr.mxu0 0.0
    %440 = vmatpush1.msra.mxu0 0.0
    %441 = vmatprep.subr.mxu0 0.0
    %442 = vmatpush1.msra.mxu0 0.0
    %443 = vmatprep.subr.mxu0 0.0
    %444 = vmatpush1.msra.mxu0 0.0
    %445 = vmatprep.subr.mxu0 0.0
    %446 = vmatpush1.msra.mxu0 0.0
    %447 = vmatprep.subr.mxu0 0.0
    %448 = vmatpush1.msra.mxu0 0.0
    %449 = vmatprep.subr.mxu0 0.0
    %450 = vmatpush1.msra.mxu0 0.0
    %451 = vmatprep.subr.mxu0 0.0
    %452 = vmatpush1.msra.mxu0 0.0
    %453 = vmatprep.subr.mxu0 0.0
    %454 = vmatpush1.msra.mxu0 0.0
    %455 = vmatprep.subr.mxu0 0.0
    %456 = vmatpush1.msra.mxu0 0.0
    %457 = vmatprep.subr.mxu0 0.0
    %458 = vmatpush1.msra.mxu0 0.0
    %459 = vmatprep.subr.mxu0 0.0
    %460 = vmatpush1.msra.mxu0 0.0
    %461 = vmatprep.subr.mxu0 0.0
    %462 = vmatpush1.msra.mxu0 0.0
    %463 = vmatprep.subr.mxu0 0.0
    %464 = vmatpush1.msra.mxu0 0.0
    %465 = vmatprep.subr.mxu0 0.0
    %466 = vmatpush1.msra.mxu0 0.0
    %467 = vmatprep.subr.mxu0 0.0
    %468 = vmatpush1.msra.mxu0 0.0
    %469 = vmatprep.subr.mxu0 0.0
    %470 = vmatpush1.msra.mxu0 0.0
    %471 = vmatprep.subr.mxu0 0.0
    %472 = vmatpush1.msra.mxu0 0.0
    %473 = vmatprep.subr.mxu0 0.0
    %474 = vmatpush1.msra.mxu0 0.0
    %475 = vmatprep.subr.mxu0 0.0
    %476 = vmatpush1.msra.mxu0 0.0
    %477 = vmatprep.subr.mxu0 0.0
    %478 = vmatpush1.msra.mxu0 0.0
    %479 = vmatprep.subr.mxu0 0.0
    %480 = vmatpush1.msra.mxu0 0.0
    %481 = vmatprep.subr.mxu0 0.0
    %482 = vmatpush1.msra.mxu0 0.0
    %483 = vmatprep.subr.mxu0 0.0
    %484 = vmatpush1.msra.mxu0 0.0
    %485 = vmatprep.subr.mxu0 0.0
    %486 = vmatpush1.msra.mxu0 0.0
    %487 = vmatprep.mubr.f32.mxu0 0.0
    %488 = vmatmul.mubr.f32.gmra.mrb[0].mxu0 %v43
    %v489 = vpop.f32.mrb[0].mxu0
    %v490 = vadd.f32 0.0, %v489
    %v491 = vpop.f32.mrb[0].mxu0
    %492 = vmatprep.mubr.f32.mxu0 0.0
    %493 = vmatmul.mubr.f32.gmra.mrb[0].mxu0 %v46
    %v494 = vpop.f32.mrb[0].mxu0
    %v495 = vadd.f32 0.0, %v494
    %v496 = vpop.f32.mrb[0].mxu0
    %497 = vdwg.mxu0
    %498 = vmatprep.subr.mxu0 0.0
    %499 = vmatpush1.msra.mxu0 %v35
    %500 = vmatprep.subr.mxu0 0.0
    %501 = vmatpush1.msra.mxu0 0.0
    %502 = vmatprep.subr.mxu0 0.0
    %503 = vmatpush1.msra.mxu0 0.0
    %504 = vmatprep.subr.mxu0 0.0
    %505 = vmatpush1.msra.mxu0 0.0
    %506 = vmatprep.subr.mxu0 0.0
    %507 = vmatpush1.msra.mxu0 0.0
    %508 = vmatprep.subr.mxu0 0.0
    %509 = vmatpush1.msra.mxu0 0.0
    %510 = vmatprep.subr.mxu0 0.0
    %511 = vmatpush1.msra.mxu0 0.0
    %512 = vmatprep.subr.mxu0 0.0
    %513 = vmatpush1.msra.mxu0 0.0
    %514 = vmatprep.subr.mxu0 0.0
    %515 = vmatpush1.msra.mxu0 0.0
    %516 = vmatprep.subr.mxu0 0.0
    %517 = vmatpush1.msra.mxu0 0.0
    %518 = vmatprep.subr.mxu0 0.0
    %519 = vmatpush1.msra.mxu0 0.0
    %520 = vmatprep.subr.mxu0 0.0
    %521 = vmatpush1.msra.mxu0 0.0
    %522 = vmatprep.subr.mxu0 0.0
    %523 = vmatpush1.msra.mxu0 0.0
    %524 = vmatprep.subr.mxu0 0.0
    %525 = vmatpush1.msra.mxu0 0.0
    %526 = vmatprep.subr.mxu0 0.0
    %527 = vmatpush1.msra.mxu0 0.0
    %528 = vmatprep.subr.mxu0 0.0
    %529 = vmatpush1.msra.mxu0 0.0
    %530 = vmatprep.subr.mxu0 0.0
    %531 = vmatpush1.msra.mxu0 0.0
    %532 = vmatprep.subr.mxu0 0.0
    %533 = vmatpush1.msra.mxu0 0.0
    %534 = vmatprep.subr.mxu0 0.0
    %535 = vmatpush1.msra.mxu0 0.0
    %536 = vmatprep.subr.mxu0 0.0
    %537 = vmatpush1.msra.mxu0 0.0
    %538 = vmatprep.subr.mxu0 0.0
    %539 = vmatpush1.msra.mxu0 0.0
    %540 = vmatprep.subr.mxu0 0.0
    %541 = vmatpush1.msra.mxu0 0.0
    %542 = vmatprep.subr.mxu0 0.0
    %543 = vmatpush1.msra.mxu0 0.0
    %544 = vmatprep.subr.mxu0 0.0
    %545 = vmatpush1.msra.mxu0 0.0
    %546 = vmatprep.subr.mxu0 0.0
    %547 = vmatpush1.msra.mxu0 0.0
    %548 = vmatprep.subr.mxu0 0.0
    %549 = vmatpush1.msra.mxu0 0.0
    %550 = vmatprep.subr.mxu0 0.0
    %551 = vmatpush1.msra.mxu0 0.0
    %552 = vmatprep.subr.mxu0 0.0
    %553 = vmatpush1.msra.mxu0 0.0
    %554 = vmatprep.subr.mxu0 0.0
    %555 = vmatpush1.msra.mxu0 0.0
    %556 = vmatprep.subr.mxu0 0.0
    %557 = vmatpush1.msra.mxu0 0.0
    %558 = vmatprep.subr.mxu0 0.0
    %559 = vmatpush1.msra.mxu0 0.0
    %560 = vmatprep.subr.mxu0 0.0
    %561 = vmatpush1.msra.mxu0 0.0
    %562 = vmatprep.mubr.f32.mxu0 0.0
    %563 = vmatmul.mubr.f32.gmra.mrb[0].mxu0 %v43
    %v564 = vpop.f32.mrb[0].mxu0
    %v565 = vadd.f32 0.0, %v564
    %v566 = vpop.f32.mrb[0].mxu0
    %567 = vmatprep.mubr.f32.mxu0 0.0
    %568 = vmatmul.mubr.f32.gmra.mrb[0].mxu0 %v46
    %v569 = vpop.f32.mrb[0].mxu0
    %v570 = vadd.f32 0.0, %v569
    %v571 = vpop.f32.mrb[0].mxu0
    %572 = vdwg.mxu0
    %573 = vmatprep.subr.mxu0 0.0
    %574 = vmatpush1.msra.mxu0 %v36
    %575 = vmatprep.subr.mxu0 0.0
    %576 = vmatpush1.msra.mxu0 0.0
    %577 = vmatprep.subr.mxu0 0.0
    %578 = vmatpush1.msra.mxu0 0.0
    %579 = vmatprep.subr.mxu0 0.0
    %580 = vmatpush1.msra.mxu0 0.0
    %581 = vmatprep.subr.mxu0 0.0
    %582 = vmatpush1.msra.mxu0 0.0
    %583 = vmatprep.subr.mxu0 0.0
    %584 = vmatpush1.msra.mxu0 0.0
    %585 = vmatprep.subr.mxu0 0.0
    %586 = vmatpush1.msra.mxu0 0.0
    %587 = vmatprep.subr.mxu0 0.0
    %588 = vmatpush1.msra.mxu0 0.0
    %589 = vmatprep.subr.mxu0 0.0
    %590 = vmatpush1.msra.mxu0 0.0
    %591 = vmatprep.subr.mxu0 0.0
    %592 = vmatpush1.msra.mxu0 0.0
    %593 = vmatprep.subr.mxu0 0.0
    %594 = vmatpush1.msra.mxu0 0.0
    %595 = vmatprep.subr.mxu0 0.0
    %596 = vmatpush1.msra.mxu0 0.0
    %597 = vmatprep.subr.mxu0 0.0
    %598 = vmatpush1.msra.mxu0 0.0
    %599 = vmatprep.subr.mxu0 0.0
    %600 = vmatpush1.msra.mxu0 0.0
    %601 = vmatprep.subr.mxu0 0.0
    %602 = vmatpush1.msra.mxu0 0.0
    %603 = vmatprep.subr.mxu0 0.0
    %604 = vmatpush1.msra.mxu0 0.0
    %605 = vmatprep.subr.mxu0 0.0
    %606 = vmatpush1.msra.mxu0 0.0
    %607 = vmatprep.subr.mxu0 0.0
    %608 = vmatpush1.msra.mxu0 0.0
    %609 = vmatprep.subr.mxu0 0.0
    %610 = vmatpush1.msra.mxu0 0.0
    %611 = vmatprep.subr.mxu0 0.0
    %612 = vmatpush1.msra.mxu0 0.0
    %613 = vmatprep.subr.mxu0 0.0
    %614 = vmatpush1.msra.mxu0 0.0
    %615 = vmatprep.subr.mxu0 0.0
    %616 = vmatpush1.msra.mxu0 0.0
    %617 = vmatprep.subr.mxu0 0.0
    %618 = vmatpush1.msra.mxu0 0.0
    %619 = vmatprep.subr.mxu0 0.0
    %620 = vmatpush1.msra.mxu0 0.0
    %621 = vmatprep.subr.mxu0 0.0
    %622 = vmatpush1.msra.mxu0 0.0
    %623 = vmatprep.subr.mxu0 0.0
    %624 = vmatpush1.msra.mxu0 0.0
    %625 = vmatprep.subr.mxu0 0.0
    %626 = vmatpush1.msra.mxu0 0.0
    %627 = vmatprep.subr.mxu0 0.0
    %628 = vmatpush1.msra.mxu0 0.0
    %629 = vmatprep.subr.mxu0 0.0
    %630 = vmatpush1.msra.mxu0 0.0
    %631 = vmatprep.subr.mxu0 0.0
    %632 = vmatpush1.msra.mxu0 0.0
    %633 = vmatprep.subr.mxu0 0.0
    %634 = vmatpush1.msra.mxu0 0.0
    %635 = vmatprep.subr.mxu0 0.0
    %636 = vmatpush1.msra.mxu0 0.0
    %637 = vmatprep.mubr.f32.mxu0 0.0
    %638 = vmatmul.mubr.f32.gmra.mrb[0].mxu0 %v43
    %v639 = vpop.f32.mrb[0].mxu0
    %v640 = vadd.f32 0.0, %v639
    %v641 = vpop.f32.mrb[0].mxu0
    %642 = vmatprep.mubr.f32.mxu0 0.0
    %643 = vmatmul.mubr.f32.gmra.mrb[0].mxu0 %v46
    %v644 = vpop.f32.mrb[0].mxu0
    %v645 = vadd.f32 0.0, %v644
    %v646 = vpop.f32.mrb[0].mxu0
    %647 = vdwg.mxu0
    %v649 = vsel %vm41, %v115, 0
    %v652 = vsel %vm41, %v120, 0
    %v655 = vsel %vm41, %v39, 0
    %v658 = vsel %vm41, %v40, 0
    %660 = vmatprep.subr.mxu0 0.0
    %661 = vmatpush1.xpose.msra.mxu0 %v655
    %662 = vmatprep.subr.mxu0 0.0
    %663 = vmatpush1.xpose.msra.mxu0 %v658
    %664 = vmatprep.subr.mxu0 0.0
    %665 = vmatpush1.xpose.msra.mxu0 0.0
    %666 = vmatprep.subr.mxu0 0.0
    %667 = vmatpush1.xpose.msra.mxu0 0.0
    %668 = vmatprep.subr.mxu0 0.0
    %669 = vmatpush1.xpose.msra.mxu0 0.0
    %670 = vmatprep.subr.mxu0 0.0
    %671 = vmatpush1.xpose.msra.mxu0 0.0
    %672 = vmatprep.subr.mxu0 0.0
    %673 = vmatpush1.xpose.msra.mxu0 0.0
    %674 = vmatprep.subr.mxu0 0.0
    %675 = vmatpush1.xpose.msra.mxu0 0.0
    %676 = vmatprep.subr.mxu0 0.0
    %677 = vmatpush1.xpose.msra.mxu0 0.0
    %678 = vmatprep.subr.mxu0 0.0
    %679 = vmatpush1.xpose.msra.mxu0 0.0
    %680 = vmatprep.subr.mxu0 0.0
    %681 = vmatpush1.xpose.msra.mxu0 0.0
    %682 = vmatprep.subr.mxu0 0.0
    %683 = vmatpush1.xpose.msra.mxu0 0.0
    %684 = vmatprep.subr.mxu0 0.0
    %685 = vmatpush1.xpose.msra.mxu0 0.0
    %686 = vmatprep.subr.mxu0 0.0
    %687 = vmatpush1.xpose.msra.mxu0 0.0
    %688 = vmatprep.subr.mxu0 0.0
    %689 = vmatpush1.xpose.msra.mxu0 0.0
    %690 = vmatprep.subr.mxu0 0.0
    %691 = vmatpush1.xpose.msra.mxu0 0.0
    %692 = vmatprep.subr.mxu0 0.0
    %693 = vmatpush1.xpose.msra.mxu0 0.0
    %694 = vmatprep.subr.mxu0 0.0
    %695 = vmatpush1.xpose.msra.mxu0 0.0
    %696 = vmatprep.subr.mxu0 0.0
    %697 = vmatpush1.xpose.msra.mxu0 0.0
    %698 = vmatprep.subr.mxu0 0.0
    %699 = vmatpush1.xpose.msra.mxu0 0.0
    %700 = vmatprep.subr.mxu0 0.0
    %701 = vmatpush1.xpose.msra.mxu0 0.0
    %702 = vmatprep.subr.mxu0 0.0
    %703 = vmatpush1.xpose.msra.mxu0 0.0
    %704 = vmatprep.subr.mxu0 0.0
    %705 = vmatpush1.xpose.msra.mxu0 0.0
    %706 = vmatprep.subr.mxu0 0.0
    %707 = vmatpush1.xpose.msra.mxu0 0.0
    %708 = vmatprep.subr.mxu0 0.0
    %709 = vmatpush1.xpose.msra.mxu0 0.0
    %710 = vmatprep.subr.mxu0 0.0
    %711 = vmatpush1.xpose.msra.mxu0 0.0
    %712 = vmatprep.subr.mxu0 0.0
    %713 = vmatpush1.xpose.msra.mxu0 0.0
    %714 = vmatprep.subr.mxu0 0.0
    %715 = vmatpush1.xpose.msra.mxu0 0.0
    %716 = vmatprep.subr.mxu0 0.0
    %717 = vmatpush1.xpose.msra.mxu0 0.0
    %718 = vmatprep.subr.mxu0 0.0
    %719 = vmatpush1.xpose.msra.mxu0 0.0
    %720 = vmatprep.subr.mxu0 0.0
    %721 = vmatpush1.xpose.msra.mxu0 0.0
    %722 = vmatprep.subr.mxu0 0.0
    %723 = vmatpush1.xpose.msra.mxu0 0.0
    %724 = vmatprep.mubr.f32.mxu0 0.0
    %725 = vmatmul.mubr.f32.gmra.mrb[0].mxu0 %v649
    %v726 = vpop.f32.mrb[0].mxu0
    %v727 = vadd.f32 0.0, %v726
    %v728 = vpop.f32.mrb[0].mxu0
    %729 = vmatprep.mubr.f32.mxu0 0.0
    %730 = vmatmul.mubr.f32.gmra.mrb[0].mxu0 %v652
    %v731 = vpop.f32.mrb[0].mxu0
    %v732 = vadd.f32 0.0, %v731
    %v733 = vpop.f32.mrb[0].mxu0
    %734 = vdwg.mxu0
    %v736 = vsel %vm41, %v190, 0
    %v739 = vsel %vm41, %v195, 0
    %741 = vmatprep.subr.mxu0 0.0
    %742 = vmatpush1.xpose.msra.mxu0 %v655
    %743 = vmatprep.subr.mxu0 0.0
    %744 = vmatpush1.xpose.msra.mxu0 %v658
    %745 = vmatprep.subr.mxu0 0.0
    %746 = vmatpush1.xpose.msra.mxu0 0.0
    %747 = vmatprep.subr.mxu0 0.0
    %748 = vmatpush1.xpose.msra.mxu0 0.0
    %749 = vmatprep.subr.mxu0 0.0
    %750 = vmatpush1.xpose.msra.mxu0 0.0
    %751 = vmatprep.subr.mxu0 0.0
    %752 = vmatpush1.xpose.msra.mxu0 0.0
    %753 = vmatprep.subr.mxu0 0.0
    %754 = vmatpush1.xpose.msra.mxu0 0.0
    %755 = vmatprep.subr.mxu0 0.0
    %756 = vmatpush1.xpose.msra.mxu0 0.0
    %757 = vmatprep.subr.mxu0 0.0
    %758 = vmatpush1.xpose.msra.mxu0 0.0
    %759 = vmatprep.subr.mxu0 0.0
    %760 = vmatpush1.xpose.msra.mxu0 0.0
    %761 = vmatprep.subr.mxu0 0.0
    %762 = vmatpush1.xpose.msra.mxu0 0.0
    %763 = vmatprep.subr.mxu0 0.0
    %764 = vmatpush1.xpose.msra.mxu0 0.0
    %765 = vmatprep.subr.mxu0 0.0
    %766 = vmatpush1.xpose.msra.mxu0 0.0
    %767 = vmatprep.subr.mxu0 0.0
    %768 = vmatpush1.xpose.msra.mxu0 0.0
    %769 = vmatprep.subr.mxu0 0.0
    %770 = vmatpush1.xpose.msra.mxu0 0.0
    %771 = vmatprep.subr.mxu0 0.0
    %772 = vmatpush1.xpose.msra.mxu0 0.0
    %773 = vmatprep.subr.mxu0 0.0
    %774 = vmatpush1.xpose.msra.mxu0 0.0
    %775 = vmatprep.subr.mxu0 0.0
    %776 = vmatpush1.xpose.msra.mxu0 0.0
    %777 = vmatprep.subr.mxu0 0.0
    %778 = vmatpush1.xpose.msra.mxu0 0.0
    %779 = vmatprep.subr.mxu0 0.0
    %780 = vmatpush1.xpose.msra.mxu0 0.0
    %781 = vmatprep.subr.mxu0 0.0
    %782 = vmatpush1.xpose.msra.mxu0 0.0
    %783 = vmatprep.subr.mxu0 0.0
    %784 = vmatpush1.xpose.msra.mxu0 0.0
    %785 = vmatprep.subr.mxu0 0.0
    %786 = vmatpush1.xpose.msra.mxu0 0.0
    %787 = vmatprep.subr.mxu0 0.0
    %788 = vmatpush1.xpose.msra.mxu0 0.0
    %789 = vmatprep.subr.mxu0 0.0
    %790 = vmatpush1.xpose.msra.mxu0 0.0
    %791 = vmatprep.subr.mxu0 0.0
    %792 = vmatpush1.xpose.msra.mxu0 0.0
    %793 = vmatprep.subr.mxu0 0.0
    %794 = vmatpush1.xpose.msra.mxu0 0.0
    %795 = vmatprep.subr.mxu0 0.0
    %796 = vmatpush1.xpose.msra.mxu0 0.0
    %797 = vmatprep.subr.mxu0 0.0
    %798 = vmatpush1.xpose.msra.mxu0 0.0
    %799 = vmatprep.subr.mxu0 0.0
    %800 = vmatpush1.xpose.msra.mxu0 0.0
    %801 = vmatprep.subr.mxu0 0.0
    %802 = vmatpush1.xpose.msra.mxu0 0.0
    %803 = vmatprep.subr.mxu0 0.0
    %804 = vmatpush1.xpose.msra.mxu0 0.0
    %805 = vmatprep.mubr.f32.mxu0 0.0
    %806 = vmatmul.mubr.f32.gmra.mrb[0].mxu0 %v736
    %v807 = vpop.f32.mrb[0].mxu0
    %v808 = vadd.f32 0.0, %v807
    %v809 = vpop.f32.mrb[0].mxu0
    %810 = vmatprep.mubr.f32.mxu0 0.0
    %811 = vmatmul.mubr.f32.gmra.mrb[0].mxu0 %v739
    %v812 = vpop.f32.mrb[0].mxu0
    %v813 = vadd.f32 0.0, %v812
    %v814 = vpop.f32.mrb[0].mxu0
    %815 = vdwg.mxu0
    %v817 = vsel %vm41, %v265, 0
    %v820 = vsel %vm41, %v270, 0
    %822 = vmatprep.subr.mxu0 0.0
    %823 = vmatpush1.xpose.msra.mxu0 %v655
    %824 = vmatprep.subr.mxu0 0.0
    %825 = vmatpush1.xpose.msra.mxu0 %v658
    %826 = vmatprep.subr.mxu0 0.0
    %827 = vmatpush1.xpose.msra.mxu0 0.0
    %828 = vmatprep.subr.mxu0 0.0
    %829 = vmatpush1.xpose.msra.mxu0 0.0
    %830 = vmatprep.subr.mxu0 0.0
    %831 = vmatpush1.xpose.msra.mxu0 0.0
    %832 = vmatprep.subr.mxu0 0.0
    %833 = vmatpush1.xpose.msra.mxu0 0.0
    %834 = vmatprep.subr.mxu0 0.0
    %835 = vmatpush1.xpose.msra.mxu0 0.0
    %836 = vmatprep.subr.mxu0 0.0
    %837 = vmatpush1.xpose.msra.mxu0 0.0
    %838 = vmatprep.subr.mxu0 0.0
    %839 = vmatpush1.xpose.msra.mxu0 0.0
    %840 = vmatprep.subr.mxu0 0.0
    %841 = vmatpush1.xpose.msra.mxu0 0.0
    %842 = vmatprep.subr.mxu0 0.0
    %843 = vmatpush1.xpose.msra.mxu0 0.0
    %844 = vmatprep.subr.mxu0 0.0
    %845 = vmatpush1.xpose.msra.mxu0 0.0
    %846 = vmatprep.subr.mxu0 0.0
    %847 = vmatpush1.xpose.msra.mxu0 0.0
    %848 = vmatprep.subr.mxu0 0.0
    %849 = vmatpush1.xpose.msra.mxu0 0.0
    %850 = vmatprep.subr.mxu0 0.0
    %851 = vmatpush1.xpose.msra.mxu0 0.0
    %852 = vmatprep.subr.mxu0 0.0
    %853 = vmatpush1.xpose.msra.mxu0 0.0
    %854 = vmatprep.subr.mxu0 0.0
    %855 = vmatpush1.xpose.msra.mxu0 0.0
    %856 = vmatprep.subr.mxu0 0.0
    %857 = vmatpush1.xpose.msra.mxu0 0.0
    %858 = vmatprep.subr.mxu0 0.0
    %859 = vmatpush1.xpose.msra.mxu0 0.0
    %860 = vmatprep.subr.mxu0 0.0
    %861 = vmatpush1.xpose.msra.mxu0 0.0
    %862 = vmatprep.subr.mxu0 0.0
    %863 = vmatpush1.xpose.msra.mxu0 0.0
    %864 = vmatprep.subr.mxu0 0.0
    %865 = vmatpush1.xpose.msra.mxu0 0.0
    %866 = vmatprep.subr.mxu0 0.0
    %867 = vmatpush1.xpose.msra.mxu0 0.0
    %868 = vmatprep.subr.mxu0 0.0
    %869 = vmatpush1.xpose.msra.mxu0 0.0
    %870 = vmatprep.subr.mxu0 0.0
    %871 = vmatpush1.xpose.msra.mxu0 0.0
    %872 = vmatprep.subr.mxu0 0.0
    %873 = vmatpush1.xpose.msra.mxu0 0.0
    %874 = vmatprep.subr.mxu0 0.0
    %875 = vmatpush1.xpose.msra.mxu0 0.0
    %876 = vmatprep.subr.mxu0 0.0
    %877 = vmatpush1.xpose.msra.mxu0 0.0
    %878 = vmatprep.subr.mxu0 0.0
    %879 = vmatpush1.xpose.msra.mxu0 0.0
    %880 = vmatprep.subr.mxu0 0.0
    %881 = vmatpush1.xpose.msra.mxu0 0.0
    %882 = vmatprep.subr.mxu0 0.0
    %883 = vmatpush1.xpose.msra.mxu0 0.0
    %884 = vmatprep.subr.mxu0 0.0
    %885 = vmatpush1.xpose.msra.mxu0 0.0
    %886 = vmatprep.mubr.f32.mxu0 0.0
    %887 = vmatmul.mubr.f32.gmra.mrb[0].mxu0 %v817
    %v888 = vpop.f32.mrb[0].mxu0
    %v889 = vadd.f32 0.0, %v888
    %v890 = vpop.f32.mrb[0].mxu0
    %891 = vmatprep.mubr.f32.mxu0 0.0
    %892 = vmatmul.mubr.f32.gmra.mrb[0].mxu0 %v820
    %v893 = vpop.f32.mrb[0].mxu0
    %v894 = vadd.f32 0.0, %v893
    %v895 = vpop.f32.mrb[0].mxu0
    %896 = vdwg.mxu0
    %v898 = vsel %vm41, %v340, 0
    %v901 = vsel %vm41, %v345, 0
    %903 = vmatprep.subr.mxu0 0.0
    %904 = vmatpush1.xpose.msra.mxu0 %v655
    %905 = vmatprep.subr.mxu0 0.0
    %906 = vmatpush1.xpose.msra.mxu0 %v658
    %907 = vmatprep.subr.mxu0 0.0
    %908 = vmatpush1.xpose.msra.mxu0 0.0
    %909 = vmatprep.subr.mxu0 0.0
    %910 = vmatpush1.xpose.msra.mxu0 0.0
    %911 = vmatprep.subr.mxu0 0.0
    %912 = vmatpush1.xpose.msra.mxu0 0.0
    %913 = vmatprep.subr.mxu0 0.0
    %914 = vmatpush1.xpose.msra.mxu0 0.0
    %915 = vmatprep.subr.mxu0 0.0
    %916 = vmatpush1.xpose.msra.mxu0 0.0
    %917 = vmatprep.subr.mxu0 0.0
    %918 = vmatpush1.xpose.msra.mxu0 0.0
    %919 = vmatprep.subr.mxu0 0.0
    %920 = vmatpush1.xpose.msra.mxu0 0.0
    %921 = vmatprep.subr.mxu0 0.0
    %922 = vmatpush1.xpose.msra.mxu0 0.0
    %923 = vmatprep.subr.mxu0 0.0
    %924 = vmatpush1.xpose.msra.mxu0 0.0
    %925 = vmatprep.subr.mxu0 0.0
    %926 = vmatpush1.xpose.msra.mxu0 0.0
    %927 = vmatprep.subr.mxu0 0.0
    %928 = vmatpush1.xpose.msra.mxu0 0.0
    %929 = vmatprep.subr.mxu0 0.0
    %930 = vmatpush1.xpose.msra.mxu0 0.0
    %931 = vmatprep.subr.mxu0 0.0
    %932 = vmatpush1.xpose.msra.mxu0 0.0
    %933 = vmatprep.subr.mxu0 0.0
    %934 = vmatpush1.xpose.msra.mxu0 0.0
    %935 = vmatprep.subr.mxu0 0.0
    %936 = vmatpush1.xpose.msra.mxu0 0.0
    %937 = vmatprep.subr.mxu0 0.0
    %938 = vmatpush1.xpose.msra.mxu0 0.0
    %939 = vmatprep.subr.mxu0 0.0
    %940 = vmatpush1.xpose.msra.mxu0 0.0
    %941 = vmatprep.subr.mxu0 0.0
    %942 = vmatpush1.xpose.msra.mxu0 0.0
    %943 = vmatprep.subr.mxu0 0.0
    %944 = vmatpush1.xpose.msra.mxu0 0.0
    %945 = vmatprep.subr.mxu0 0.0
    %946 = vmatpush1.xpose.msra.mxu0 0.0
    %947 = vmatprep.subr.mxu0 0.0
    %948 = vmatpush1.xpose.msra.mxu0 0.0
    %949 = vmatprep.subr.mxu0 0.0
    %950 = vmatpush1.xpose.msra.mxu0 0.0
    %951 = vmatprep.subr.mxu0 0.0
    %952 = vmatpush1.xpose.msra.mxu0 0.0
    %953 = vmatprep.subr.mxu0 0.0
    %954 = vmatpush1.xpose.msra.mxu0 0.0
    %955 = vmatprep.subr.mxu0 0.0
    %956 = vmatpush1.xpose.msra.mxu0 0.0
    %957 = vmatprep.subr.mxu0 0.0
    %958 = vmatpush1.xpose.msra.mxu0 0.0
    %959 = vmatprep.subr.mxu0 0.0
    %960 = vmatpush1.xpose.msra.mxu0 0.0
    %961 = vmatprep.subr.mxu0 0.0
    %962 = vmatpush1.xpose.msra.mxu0 0.0
    %963 = vmatprep.subr.mxu0 0.0
    %964 = vmatpush1.xpose.msra.mxu0 0.0
    %965 = vmatprep.subr.mxu0 0.0
    %966 = vmatpush1.xpose.msra.mxu0 0.0
    %967 = vmatprep.mubr.f32.mxu0 0.0
    %968 = vmatmul.mubr.f32.gmra.mrb[0].mxu0 %v898
    %v969 = vpop.f32.mrb[0].mxu0
    %v970 = vadd.f32 0.0, %v969
    %v971 = vpop.f32.mrb[0].mxu0
    %972 = vmatprep.mubr.f32.mxu0 0.0
    %973 = vmatmul.mubr.f32.gmra.mrb[0].mxu0 %v901
    %v974 = vpop.f32.mrb[0].mxu0
    %v975 = vadd.f32 0.0, %v974
    %v976 = vpop.f32.mrb[0].mxu0
    %977 = vdwg.mxu0
    %v979 = vsel %vm41, %v415, 0
    %v982 = vsel %vm41, %v420, 0
    %984 = vmatprep.subr.mxu0 0.0
    %985 = vmatpush1.xpose.msra.mxu0 %v655
    %986 = vmatprep.subr.mxu0 0.0
    %987 = vmatpush1.xpose.msra.mxu0 %v658
    %988 = vmatprep.subr.mxu0 0.0
    %989 = vmatpush1.xpose.msra.mxu0 0.0
    %990 = vmatprep.subr.mxu0 0.0
    %991 = vmatpush1.xpose.msra.mxu0 0.0
    %992 = vmatprep.subr.mxu0 0.0
    %993 = vmatpush1.xpose.msra.mxu0 0.0
    %994 = vmatprep.subr.mxu0 0.0
    %995 = vmatpush1.xpose.msra.mxu0 0.0
    %996 = vmatprep.subr.mxu0 0.0
    %997 = vmatpush1.xpose.msra.mxu0 0.0
    %998 = vmatprep.subr.mxu0 0.0
    %999 = vmatpush1.xpose.msra.mxu0 0.0
    %1000 = vmatprep.subr.mxu0 0.0
    %1001 = vmatpush1.xpose.msra.mxu0 0.0
    %1002 = vmatprep.subr.mxu0 0.0
    %1003 = vmatpush1.xpose.msra.mxu0 0.0
    %1004 = vmatprep.subr.mxu0 0.0
    %1005 = vmatpush1.xpose.msra.mxu0 0.0
    %1006 = vmatprep.subr.mxu0 0.0
    %1007 = vmatpush1.xpose.msra.mxu0 0.0
    %1008 = vmatprep.subr.mxu0 0.0
    %1009 = vmatpush1.xpose.msra.mxu0 0.0
    %1010 = vmatprep.subr.mxu0 0.0
    %1011 = vmatpush1.xpose.msra.mxu0 0.0
    %1012 = vmatprep.subr.mxu0 0.0
    %1013 = vmatpush1.xpose.msra.mxu0 0.0
    %1014 = vmatprep.subr.mxu0 0.0
    %1015 = vmatpush1.xpose.msra.mxu0 0.0
    %1016 = vmatprep.subr.mxu0 0.0
    %1017 = vmatpush1.xpose.msra.mxu0 0.0
    %1018 = vmatprep.subr.mxu0 0.0
    %1019 = vmatpush1.xpose.msra.mxu0 0.0
    %1020 = vmatprep.subr.mxu0 0.0
    %1021 = vmatpush1.xpose.msra.mxu0 0.0
    %1022 = vmatprep.subr.mxu0 0.0
    %1023 = vmatpush1.xpose.msra.mxu0 0.0
    %1024 = vmatprep.subr.mxu0 0.0
    %1025 = vmatpush1.xpose.msra.mxu0 0.0
    %1026 = vmatprep.subr.mxu0 0.0
    %1027 = vmatpush1.xpose.msra.mxu0 0.0
    %1028 = vmatprep.subr.mxu0 0.0
    %1029 = vmatpush1.xpose.msra.mxu0 0.0
    %1030 = vmatprep.subr.mxu0 0.0
    %1031 = vmatpush1.xpose.msra.mxu0 0.0
    %1032 = vmatprep.subr.mxu0 0.0
    %1033 = vmatpush1.xpose.msra.mxu0 0.0
    %1034 = vmatprep.subr.mxu0 0.0
    %1035 = vmatpush1.xpose.msra.mxu0 0.0
    %1036 = vmatprep.subr.mxu0 0.0
    %1037 = vmatpush1.xpose.msra.mxu0 0.0
    %1038 = vmatprep.subr.mxu0 0.0
    %1039 = vmatpush1.xpose.msra.mxu0 0.0
    %1040 = vmatprep.subr.mxu0 0.0
    %1041 = vmatpush1.xpose.msra.mxu0 0.0
    %1042 = vmatprep.subr.mxu0 0.0
    %1043 = vmatpush1.xpose.msra.mxu0 0.0
    %1044 = vmatprep.subr.mxu0 0.0
    %1045 = vmatpush1.xpose.msra.mxu0 0.0
    %1046 = vmatprep.subr.mxu0 0.0
    %1047 = vmatpush1.xpose.msra.mxu0 0.0
    %1048 = vmatprep.mubr.f32.mxu0 0.0
    %1049 = vmatmul.mubr.f32.gmra.mrb[0].mxu0 %v979
    %v1050 = vpop.f32.mrb[0].mxu0
    %v1051 = vadd.f32 0.0, %v1050
    %v1052 = vpop.f32.mrb[0].mxu0
    %1053 = vmatprep.mubr.f32.mxu0 0.0
    %1054 = vmatmul.mubr.f32.gmra.mrb[0].mxu0 %v982
    %v1055 = vpop.f32.mrb[0].mxu0
    %v1056 = vadd.f32 0.0, %v1055
    %v1057 = vpop.f32.mrb[0].mxu0
    %1058 = vdwg.mxu0
    %v1060 = vsel %vm41, %v490, 0
    %v1063 = vsel %vm41, %v495, 0
    %1065 = vmatprep.subr.mxu0 0.0
    %1066 = vmatpush1.xpose.msra.mxu0 %v655
    %1067 = vmatprep.subr.mxu0 0.0
    %1068 = vmatpush1.xpose.msra.mxu0 %v658
    %1069 = vmatprep.subr.mxu0 0.0
    %1070 = vmatpush1.xpose.msra.mxu0 0.0
    %1071 = vmatprep.subr.mxu0 0.0
    %1072 = vmatpush1.xpose.msra.mxu0 0.0
    %1073 = vmatprep.subr.mxu0 0.0
    %1074 = vmatpush1.xpose.msra.mxu0 0.0
    %1075 = vmatprep.subr.mxu0 0.0
    %1076 = vmatpush1.xpose.msra.mxu0 0.0
    %1077 = vmatprep.subr.mxu0 0.0
    %1078 = vmatpush1.xpose.msra.mxu0 0.0
    %1079 = vmatprep.subr.mxu0 0.0
    %1080 = vmatpush1.xpose.msra.mxu0 0.0
    %1081 = vmatprep.subr.mxu0 0.0
    %1082 = vmatpush1.xpose.msra.mxu0 0.0
    %1083 = vmatprep.subr.mxu0 0.0
    %1084 = vmatpush1.xpose.msra.mxu0 0.0
    %1085 = vmatprep.subr.mxu0 0.0
    %1086 = vmatpush1.xpose.msra.mxu0 0.0
    %1087 = vmatprep.subr.mxu0 0.0
    %1088 = vmatpush1.xpose.msra.mxu0 0.0
    %1089 = vmatprep.subr.mxu0 0.0
    %1090 = vmatpush1.xpose.msra.mxu0 0.0
    %1091 = vmatprep.subr.mxu0 0.0
    %1092 = vmatpush1.xpose.msra.mxu0 0.0
    %1093 = vmatprep.subr.mxu0 0.0
    %1094 = vmatpush1.xpose.msra.mxu0 0.0
    %1095 = vmatprep.subr.mxu0 0.0
    %1096 = vmatpush1.xpose.msra.mxu0 0.0
    %1097 = vmatprep.subr.mxu0 0.0
    %1098 = vmatpush1.xpose.msra.mxu0 0.0
    %1099 = vmatprep.subr.mxu0 0.0
    %1100 = vmatpush1.xpose.msra.mxu0 0.0
    %1101 = vmatprep.subr.mxu0 0.0
    %1102 = vmatpush1.xpose.msra.mxu0 0.0
    %1103 = vmatprep.subr.mxu0 0.0
    %1104 = vmatpush1.xpose.msra.mxu0 0.0
    %1105 = vmatprep.subr.mxu0 0.0
    %1106 = vmatpush1.xpose.msra.mxu0 0.0
    %1107 = vmatprep.subr.mxu0 0.0
    %1108 = vmatpush1.xpose.msra.mxu0 0.0
    %1109 = vmatprep.subr.mxu0 0.0
    %1110 = vmatpush1.xpose.msra.mxu0 0.0
    %1111 = vmatprep.subr.mxu0 0.0
    %1112 = vmatpush1.xpose.msra.mxu0 0.0
    %1113 = vmatprep.subr.mxu0 0.0
    %1114 = vmatpush1.xpose.msra.mxu0 0.0
    %1115 = vmatprep.subr.mxu0 0.0
    %1116 = vmatpush1.xpose.msra.mxu0 0.0
    %1117 = vmatprep.subr.mxu0 0.0
    %1118 = vmatpush1.xpose.msra.mxu0 0.0
    %1119 = vmatprep.subr.mxu0 0.0
    %1120 = vmatpush1.xpose.msra.mxu0 0.0
    %1121 = vmatprep.subr.mxu0 0.0
    %1122 = vmatpush1.xpose.msra.mxu0 0.0
    %1123 = vmatprep.subr.mxu0 0.0
    %1124 = vmatpush1.xpose.msra.mxu0 0.0
    %1125 = vmatprep.subr.mxu0 0.0
    %1126 = vmatpush1.xpose.msra.mxu0 0.0
    %1127 = vmatprep.subr.mxu0 0.0
    %1128 = vmatpush1.xpose.msra.mxu0 0.0
    %1129 = vmatprep.mubr.f32.mxu0 0.0
    %1130 = vmatmul.mubr.f32.gmra.mrb[0].mxu0 %v1060
    %v1131 = vpop.f32.mrb[0].mxu0
    %v1132 = vadd.f32 0.0, %v1131
    %v1133 = vpop.f32.mrb[0].mxu0
    %1134 = vmatprep.mubr.f32.mxu0 0.0
    %1135 = vmatmul.mubr.f32.gmra.mrb[0].mxu0 %v1063
    %v1136 = vpop.f32.mrb[0].mxu0
    %v1137 = vadd.f32 0.0, %v1136
    %v1138 = vpop.f32.mrb[0].mxu0
    %1139 = vdwg.mxu0
    %v1141 = vsel %vm41, %v565, 0
    %v1144 = vsel %vm41, %v570, 0
    %1146 = vmatprep.subr.mxu0 0.0
    %1147 = vmatpush1.xpose.msra.mxu0 %v655
    %1148 = vmatprep.subr.mxu0 0.0
    %1149 = vmatpush1.xpose.msra.mxu0 %v658
    %1150 = vmatprep.subr.mxu0 0.0
    %1151 = vmatpush1.xpose.msra.mxu0 0.0
    %1152 = vmatprep.subr.mxu0 0.0
    %1153 = vmatpush1.xpose.msra.mxu0 0.0
    %1154 = vmatprep.subr.mxu0 0.0
    %1155 = vmatpush1.xpose.msra.mxu0 0.0
    %1156 = vmatprep.subr.mxu0 0.0
    %1157 = vmatpush1.xpose.msra.mxu0 0.0
    %1158 = vmatprep.subr.mxu0 0.0
    %1159 = vmatpush1.xpose.msra.mxu0 0.0
    %1160 = vmatprep.subr.mxu0 0.0
    %1161 = vmatpush1.xpose.msra.mxu0 0.0
    %1162 = vmatprep.subr.mxu0 0.0
    %1163 = vmatpush1.xpose.msra.mxu0 0.0
    %1164 = vmatprep.subr.mxu0 0.0
    %1165 = vmatpush1.xpose.msra.mxu0 0.0
    %1166 = vmatprep.subr.mxu0 0.0
    %1167 = vmatpush1.xpose.msra.mxu0 0.0
    %1168 = vmatprep.subr.mxu0 0.0
    %1169 = vmatpush1.xpose.msra.mxu0 0.0
    %1170 = vmatprep.subr.mxu0 0.0
    %1171 = vmatpush1.xpose.msra.mxu0 0.0
    %1172 = vmatprep.subr.mxu0 0.0
    %1173 = vmatpush1.xpose.msra.mxu0 0.0
    %1174 = vmatprep.subr.mxu0 0.0
    %1175 = vmatpush1.xpose.msra.mxu0 0.0
    %1176 = vmatprep.subr.mxu0 0.0
    %1177 = vmatpush1.xpose.msra.mxu0 0.0
    %1178 = vmatprep.subr.mxu0 0.0
    %1179 = vmatpush1.xpose.msra.mxu0 0.0
    %1180 = vmatprep.subr.mxu0 0.0
    %1181 = vmatpush1.xpose.msra.mxu0 0.0
    %1182 = vmatprep.subr.mxu0 0.0
    %1183 = vmatpush1.xpose.msra.mxu0 0.0
    %1184 = vmatprep.subr.mxu0 0.0
    %1185 = vmatpush1.xpose.msra.mxu0 0.0
    %1186 = vmatprep.subr.mxu0 0.0
    %1187 = vmatpush1.xpose.msra.mxu0 0.0
    %1188 = vmatprep.subr.mxu0 0.0
    %1189 = vmatpush1.xpose.msra.mxu0 0.0
    %1190 = vmatprep.subr.mxu0 0.0
    %1191 = vmatpush1.xpose.msra.mxu0 0.0
    %1192 = vmatprep.subr.mxu0 0.0
    %1193 = vmatpush1.xpose.msra.mxu0 0.0
    %1194 = vmatprep.subr.mxu0 0.0
    %1195 = vmatpush1.xpose.msra.mxu0 0.0
    %1196 = vmatprep.subr.mxu0 0.0
    %1197 = vmatpush1.xpose.msra.mxu0 0.0
    %1198 = vmatprep.subr.mxu0 0.0
    %1199 = vmatpush1.xpose.msra.mxu0 0.0
    %1200 = vmatprep.subr.mxu0 0.0
    %1201 = vmatpush1.xpose.msra.mxu0 0.0
    %1202 = vmatprep.subr.mxu0 0.0
    %1203 = vmatpush1.xpose.msra.mxu0 0.0
    %1204 = vmatprep.subr.mxu0 0.0
    %1205 = vmatpush1.xpose.msra.mxu0 0.0
    %1206 = vmatprep.subr.mxu0 0.0
    %1207 = vmatpush1.xpose.msra.mxu0 0.0
    %1208 = vmatprep.subr.mxu0 0.0
    %1209 = vmatpush1.xpose.msra.mxu0 0.0
    %1210 = vmatprep.mubr.f32.mxu0 0.0
    %1211 = vmatmul.mubr.f32.gmra.mrb[0].mxu0 %v1141
    %v1212 = vpop.f32.mrb[0].mxu0
    %v1213 = vadd.f32 0.0, %v1212
    %v1214 = vpop.f32.mrb[0].mxu0
    %1215 = vmatprep.mubr.f32.mxu0 0.0
    %1216 = vmatmul.mubr.f32.gmra.mrb[0].mxu0 %v1144
    %v1217 = vpop.f32.mrb[0].mxu0
    %v1218 = vadd.f32 0.0, %v1217
    %v1219 = vpop.f32.mrb[0].mxu0
    %1220 = vdwg.mxu0
    %v1222 = vsel %vm41, %v640, 0
    %v1225 = vsel %vm41, %v645, 0
    %1227 = vmatprep.subr.mxu0 0.0
    %1228 = vmatpush1.xpose.msra.mxu0 %v655
    %1229 = vmatprep.subr.mxu0 0.0
    %1230 = vmatpush1.xpose.msra.mxu0 %v658
    %1231 = vmatprep.subr.mxu0 0.0
    %1232 = vmatpush1.xpose.msra.mxu0 0.0
    %1233 = vmatprep.subr.mxu0 0.0
    %1234 = vmatpush1.xpose.msra.mxu0 0.0
    %1235 = vmatprep.subr.mxu0 0.0
    %1236 = vmatpush1.xpose.msra.mxu0 0.0
    %1237 = vmatprep.subr.mxu0 0.0
    %1238 = vmatpush1.xpose.msra.mxu0 0.0
    %1239 = vmatprep.subr.mxu0 0.0
    %1240 = vmatpush1.xpose.msra.mxu0 0.0
    %1241 = vmatprep.subr.mxu0 0.0
    %1242 = vmatpush1.xpose.msra.mxu0 0.0
    %1243 = vmatprep.subr.mxu0 0.0
    %1244 = vmatpush1.xpose.msra.mxu0 0.0
    %1245 = vmatprep.subr.mxu0 0.0
    %1246 = vmatpush1.xpose.msra.mxu0 0.0
    %1247 = vmatprep.subr.mxu0 0.0
    %1248 = vmatpush1.xpose.msra.mxu0 0.0
    %1249 = vmatprep.subr.mxu0 0.0
    %1250 = vmatpush1.xpose.msra.mxu0 0.0
    %1251 = vmatprep.subr.mxu0 0.0
    %1252 = vmatpush1.xpose.msra.mxu0 0.0
    %1253 = vmatprep.subr.mxu0 0.0
    %1254 = vmatpush1.xpose.msra.mxu0 0.0
    %1255 = vmatprep.subr.mxu0 0.0
    %1256 = vmatpush1.xpose.msra.mxu0 0.0
    %1257 = vmatprep.subr.mxu0 0.0
    %1258 = vmatpush1.xpose.msra.mxu0 0.0
    %1259 = vmatprep.subr.mxu0 0.0
    %1260 = vmatpush1.xpose.msra.mxu0 0.0
    %1261 = vmatprep.subr.mxu0 0.0
    %1262 = vmatpush1.xpose.msra.mxu0 0.0
    %1263 = vmatprep.subr.mxu0 0.0
    %1264 = vmatpush1.xpose.msra.mxu0 0.0
    %1265 = vmatprep.subr.mxu0 0.0
    %1266 = vmatpush1.xpose.msra.mxu0 0.0
    %1267 = vmatprep.subr.mxu0 0.0
    %1268 = vmatpush1.xpose.msra.mxu0 0.0
    %1269 = vmatprep.subr.mxu0 0.0
    %1270 = vmatpush1.xpose.msra.mxu0 0.0
    %1271 = vmatprep.subr.mxu0 0.0
    %1272 = vmatpush1.xpose.msra.mxu0 0.0
    %1273 = vmatprep.subr.mxu0 0.0
    %1274 = vmatpush1.xpose.msra.mxu0 0.0
    %1275 = vmatprep.subr.mxu0 0.0
    %1276 = vmatpush1.xpose.msra.mxu0 0.0
    %1277 = vmatprep.subr.mxu0 0.0
    %1278 = vmatpush1.xpose.msra.mxu0 0.0
    %1279 = vmatprep.subr.mxu0 0.0
    %1280 = vmatpush1.xpose.msra.mxu0 0.0
    %1281 = vmatprep.subr.mxu0 0.0
    %1282 = vmatpush1.xpose.msra.mxu0 0.0
    %1283 = vmatprep.subr.mxu0 0.0
    %1284 = vmatpush1.xpose.msra.mxu0 0.0
    %1285 = vmatprep.subr.mxu0 0.0
    %1286 = vmatpush1.xpose.msra.mxu0 0.0
    %1287 = vmatprep.subr.mxu0 0.0
    %1288 = vmatpush1.xpose.msra.mxu0 0.0
    %1289 = vmatprep.subr.mxu0 0.0
    %1290 = vmatpush1.xpose.msra.mxu0 0.0
    %1291 = vmatprep.mubr.f32.mxu0 0.0
    %1292 = vmatmul.mubr.f32.gmra.mrb[0].mxu0 %v1222
    %v1293 = vpop.f32.mrb[0].mxu0
    %v1294 = vadd.f32 0.0, %v1293
    %v1295 = vpop.f32.mrb[0].mxu0
    %1296 = vmatprep.mubr.f32.mxu0 0.0
    %1297 = vmatmul.mubr.f32.gmra.mrb[0].mxu0 %v1225
    %v1298 = vpop.f32.mrb[0].mxu0
    %v1299 = vadd.f32 0.0, %v1298
    %v1300 = vpop.f32.mrb[0].mxu0
    %1301 = vdwg.mxu0
    %vm1302 = vcmask 130048
    %1303 = vst.msk [vmem:[#allocation5] sm:$0xff] %vm1302, %v727
    %1304 = vst.msk [vmem:[#allocation5 + $0x8] sm:$0xff] %vm1302, %v732
    %1305 = vst.msk [vmem:[#allocation5 + $0x10] sm:$0xff] %vm1302, %v808
    %1306 = vst.msk [vmem:[#allocation5 + $0x18] sm:$0xff] %vm1302, %v813
    %1307 = vst.msk [vmem:[#allocation5 + $0x20] sm:$0xff] %vm1302, %v889
    %1308 = vst.msk [vmem:[#allocation5 + $0x28] sm:$0xff] %vm1302, %v894
    %1309 = vst.msk [vmem:[#allocation5 + $0x30] sm:$0xff] %vm1302, %v970
    %1310 = vst.msk [vmem:[#allocation5 + $0x38] sm:$0xff] %vm1302, %v975
    %1311 = vst.msk [vmem:[#allocation5 + $0x40] sm:$0xff] %vm1302, %v1051
    %1312 = vst.msk [vmem:[#allocation5 + $0x48] sm:$0xff] %vm1302, %v1056
    %1313 = vst.msk [vmem:[#allocation5 + $0x50] sm:$0xff] %vm1302, %v1132
    %1314 = vst.msk [vmem:[#allocation5 + $0x58] sm:$0xff] %vm1302, %v1137
    %1315 = vst.msk [vmem:[#allocation5 + $0x60] sm:$0xff] %vm1302, %v1213
    %1316 = vst.msk [vmem:[#allocation5 + $0x68] sm:$0xff] %vm1302, %v1218
    %1317 = vst.msk [vmem:[#allocation5 + $0x70] sm:$0xff] %vm1302, %v1294
    %1318 = vst.msk [vmem:[#allocation5 + $0x78] sm:$0xff] %vm1302, %v1299
    // Predicated region
    $region18: #{tpu_custom_call.1} parent=1 // pred_check
      _
    $region19: #{tpu_custom_call.1} parent=1 // pred_check_branch
      %1320 = sbr.rel (0) target = $region21
    $region20: #{tpu_custom_call.1} parent=1 // pred_region
      %s1322 = ssub.s32 2048, 2048
      %1323 = vsyncadd [#allocation4], %s1322
      %s1324 = sshll.u32 [#allocation5], 4
      %s1325 = int_to_ptr.vmem [resolvable:$true] %s1324
      %1330 = dma.vmem_to_hbm [thread:$0]  %s1325, 2048, %s3, [#allocation4], 128, 128, 8
    $region21: #{tpu_custom_call.1} parent=1 // pred_fallthru
      _
    // Predicated region
    $region22: #{tpu_custom_call.1} parent=1 // pred_check
      _
    $region23: #{tpu_custom_call.1} parent=1 // pred_check_branch
      %1332 = sbr.rel (0) target = $region25
    $region24: #{tpu_custom_call.1} parent=1 // pred_region
      %1333 = dma.done [#allocation4], 2048
    $region25: #{tpu_custom_call.1} parent=1 // pred_fallthru
      _
    %1334 = vsyncpa [#allocation3], 1
    %1335 = vsyncpa [#allocation4], 1

</llo_original>
